<compile_context>
chip_gen: v7x
topology: tpu7x:2x2x1
jax: 0.10.0
libtpu: 0.0.40
codegen_flags: <defaults>
</compile_context>

<pallas_src>
import math

import jax
import jax.numpy as jnp
from jax.experimental import pallas as pl
from jax.experimental.pallas import tpu as pltpu

D_IN, H1, H2, H3, D_OUT = 72, 80, 40, 15, 2


def _mlp_kernel(x_ref,
                w1_ref, b1_ref,
                w2_ref, b2_ref,
                w3_ref, b3_ref,
                w4_ref, b4_ref,
                o_ref):
    """All four matmuls (MXU, bf16 in / f32 acc) + bias + ReLU fused."""
    # Hoist bias reads (read once; cheap insurance against re-materialized
    # broadcasts if this body is ever wrapped in an inner loop).
    b1 = b1_ref[...]
    b2 = b2_ref[...]
    b3 = b3_ref[...]
    b4 = b4_ref[...]

    x = x_ref[...]                                                   # bf16
    h = jnp.dot(x, w1_ref[...], preferred_element_type=jnp.float32) + b1
    h = jnp.maximum(h, 0.0).astype(jnp.bfloat16)
    h = jnp.dot(h, w2_ref[...], preferred_element_type=jnp.float32) + b2
    h = jnp.maximum(h, 0.0).astype(jnp.bfloat16)
    h = jnp.dot(h, w3_ref[...], preferred_element_type=jnp.float32) + b3
    h = jnp.maximum(h, 0.0).astype(jnp.bfloat16)
    y = jnp.dot(h, w4_ref[...], preferred_element_type=jnp.float32) + b4
    o_ref[...] = y.astype(o_ref.dtype)


def _round_up(n, m):
    return ((n + m - 1) // m) * m


def _vmem_limit_bytes(tile):
    # Generous per-step estimate: bf16 x blocks (double-buffered), f32
    # lane-padded intermediates, f32 out blocks (double-buffered), weights.
    est = (2 * tile * 128 * 2      # x blocks (bf16, lane-padded)
           + 5 * tile * 128 * 4    # f32 intermediates / result regs
           + 2 * tile * 128 * 4    # out blocks
           + 1 * 1024 * 1024)      # weights + biases incl. layout padding
    # Never go below the v6e/v7x default (32 MiB); allow up to 64 MiB for
    # very large tiles (v5e's default scoped limit is only 16 MiB).
    return int(min(max(2 * est, 32 * 1024 * 1024), 64 * 1024 * 1024))


def embedding_net_forward(x, params, *, batch_tile=1024):
    """x: [B, 72] float32.  params: w1..w4 as (in, out), b1..b4 as (1, out)."""
    B, d = x.shape
    assert d == D_IN

    # --- choose an effective batch tile -------------------------------------
    padded_min = _round_up(B, 8)              # sublane-aligned batch
    tile = min(batch_tile, padded_min)
    if tile >= padded_min and B > 8:
        # A single mega-tile would serialize onto one TensorCore on v7x; keep
        # at least 2 grid steps so the "parallel" axis can shard across cores.
        tile = max(8, _round_up(pl.cdiv(padded_min, 2), 8))
    tile = max(tile, 8)
    padded_B = _round_up(B, tile)

    # --- bf16 inputs for the MXU (f32 accumulation inside the kernel) -------
    xb = x.astype(jnp.bfloat16)
    if padded_B != B:
        xb = jnp.pad(xb, ((0, padded_B - B), (0, 0)))

    w = [params[f"w{i}"].astype(jnp.bfloat16) for i in range(1, 5)]
    b = [params[f"b{i}"].astype(jnp.float32) for i in range(1, 5)]

    # Weight/bias specs are grid-invariant (constant index_map) -> fetched
    # once and kept resident in VMEM across all grid steps.
    full = lambda shape: pl.BlockSpec(shape, lambda i: (0, 0))

    out = pl.pallas_call(
        _mlp_kernel,
        out_shape=jax.ShapeDtypeStruct((padded_B, D_OUT), jnp.float32),
        grid_spec=pltpu.PrefetchScalarGridSpec(
            num_scalar_prefetch=0,
            grid=(padded_B // tile,),
            in_specs=[
                pl.BlockSpec((tile, D_IN), lambda i: (i, 0)),
                full((D_IN, H1)), full((1, H1)),
                full((H1, H2)), full((1, H2)),
                full((H2, H3)), full((1, H3)),
                full((H3, D_OUT)), full((1, D_OUT)),
            ],
            out_specs=pl.BlockSpec((tile, D_OUT), lambda i: (i, 0)),
        ),
        compiler_params=pltpu.CompilerParams(
            dimension_semantics=("parallel",),
            vmem_limit_bytes=_vmem_limit_bytes(tile)),
    )(xb, w[0], b[0], w[1], b[1], w[2], b[2], w[3], b[3])

    return out[:B] if padded_B != B else out


def init_params(key):
    """Deterministic init mimicking nn.Linear default: U(+-1/sqrt(fan_in))."""
    dims = [(D_IN, H1), (H1, H2), (H2, H3), (H3, D_OUT)]
    params = {}
    keys = jax.random.split(key, 2 * len(dims))
    for li, (fin, fout) in enumerate(dims, start=1):
        bound = 1.0 / math.sqrt(fin)
        kw, kb = keys[2 * (li - 1)], keys[2 * (li - 1) + 1]
        params[f"w{li}"] = jax.random.uniform(
            kw, (fin, fout), jnp.float32, minval=-bound, maxval=bound)
        params[f"b{li}"] = jax.random.uniform(
            kb, (1, fout), jnp.float32, minval=-bound, maxval=bound)
    return params


def _reference_forward(x, params):
    h = jnp.maximum(x @ params["w1"] + params["b1"], 0.0)
    h = jnp.maximum(h @ params["w2"] + params["b2"], 0.0)
    h = jnp.maximum(h @ params["w3"] + params["b3"], 0.0)
    return h @ params["w4"] + params["b4"]


if __name__ == "__main__":
    key = jax.random.PRNGKey(0)
    kp, kx1, kx2 = jax.random.split(key, 3)
    params = init_params(kp)

    # Small, deterministic inputs (bf16 MXU path -> loosened tolerance vs f32 ref).
    B1 = 16
    x1 = jax.random.normal(kx1, (B1, D_IN), jnp.float32)
    out1 = jax.block_until_ready(embedding_net_forward(x1, params))
    ref1 = _reference_forward(x1, params)
    assert out1.shape == (B1, D_OUT)
    assert jnp.allclose(out1, ref1, atol=2e-2, rtol=2e-2)

    # Ragged batch exercises the pad-and-slice path.
    B2 = 5
    x2 = jax.random.normal(kx2, (B2, D_IN), jnp.float32)
    out2 = jax.block_until_ready(embedding_net_forward(x2, params))
    ref2 = _reference_forward(x2, params)
    assert out2.shape == (B2, D_OUT)
    assert jnp.allclose(out2, ref2, atol=2e-2, rtol=2e-2)

    print("KERNEL_OK")
</pallas_src>

<mosaic_0001>
module attributes {stable_mosaic.version = 11 : i64} {
  func.func @_mlp_kernel(%arg0: i32, %arg1: memref<8x72xbf16, #tpu.memory_space<vmem>>, %arg2: memref<72x80xbf16, #tpu.memory_space<vmem>>, %arg3: memref<1x80xf32, #tpu.memory_space<vmem>>, %arg4: memref<80x40xbf16, #tpu.memory_space<vmem>>, %arg5: memref<1x40xf32, #tpu.memory_space<vmem>>, %arg6: memref<40x15xbf16, #tpu.memory_space<vmem>>, %arg7: memref<1x15xf32, #tpu.memory_space<vmem>>, %arg8: memref<15x2xbf16, #tpu.memory_space<vmem>>, %arg9: memref<1x2xf32, #tpu.memory_space<vmem>>, %arg10: memref<8x2xf32, #tpu.memory_space<vmem>>) attributes {dimension_semantics = [#tpu.dimension_semantics<parallel>], iteration_bounds = array<i64: 2>, scalar_prefetch = 0 : i64, scratch_operands = 0 : i64, tpu.core_type = #tpu.core_type<tc>, window_params = [{transform_indices = @transform_0, window_bounds = array<i64: 8, 72>}, {pipeline_mode = #tpu.pipeline_mode<synchronous>, transform_indices = @transform_1, window_bounds = array<i64: 72, 80>}, {pipeline_mode = #tpu.pipeline_mode<synchronous>, transform_indices = @transform_2, window_bounds = array<i64: 1, 80>}, {pipeline_mode = #tpu.pipeline_mode<synchronous>, transform_indices = @transform_3, window_bounds = array<i64: 80, 40>}, {pipeline_mode = #tpu.pipeline_mode<synchronous>, transform_indices = @transform_4, window_bounds = array<i64: 1, 40>}, {pipeline_mode = #tpu.pipeline_mode<synchronous>, transform_indices = @transform_5, window_bounds = array<i64: 40, 15>}, {pipeline_mode = #tpu.pipeline_mode<synchronous>, transform_indices = @transform_6, window_bounds = array<i64: 1, 15>}, {pipeline_mode = #tpu.pipeline_mode<synchronous>, transform_indices = @transform_7, window_bounds = array<i64: 15, 2>}, {pipeline_mode = #tpu.pipeline_mode<synchronous>, transform_indices = @transform_8, window_bounds = array<i64: 1, 2>}, {transform_indices = @transform_9, window_bounds = array<i64: 8, 2>}]} {
    %c0 = arith.constant 0 : index
    %c0_0 = arith.constant 0 : index
    %0 = vector.load %arg3[%c0, %c0_0] : memref<1x80xf32, #tpu.memory_space<vmem>>, vector<1x80xf32>
    %c0_1 = arith.constant 0 : index
    %c0_2 = arith.constant 0 : index
    %1 = vector.load %arg5[%c0_1, %c0_2] : memref<1x40xf32, #tpu.memory_space<vmem>>, vector<1x40xf32>
    %c0_3 = arith.constant 0 : index
    %c0_4 = arith.constant 0 : index
    %2 = vector.load %arg7[%c0_3, %c0_4] : memref<1x15xf32, #tpu.memory_space<vmem>>, vector<1x15xf32>
    %c0_5 = arith.constant 0 : index
    %c0_6 = arith.constant 0 : index
    %3 = vector.load %arg9[%c0_5, %c0_6] : memref<1x2xf32, #tpu.memory_space<vmem>>, vector<1x2xf32>
    %c0_7 = arith.constant 0 : index
    %c0_8 = arith.constant 0 : index
    %4 = vector.load %arg1[%c0_7, %c0_8] : memref<8x72xbf16, #tpu.memory_space<vmem>>, vector<8x72xbf16>
    %c0_9 = arith.constant 0 : index
    %c0_10 = arith.constant 0 : index
    %5 = vector.load %arg2[%c0_9, %c0_10] : memref<72x80xbf16, #tpu.memory_space<vmem>>, vector<72x80xbf16>
    %cst = arith.constant dense<0.000000e+00> : vector<8x80xf32>
    %6 = tpu.matmul %4, %5, %cst {dimension_numbers = #tpu.dot_dimension_numbers<[1], [0], [0], [1], [0, 0, 1, 1], [], []>} : vector<8x72xbf16>, vector<72x80xbf16>, vector<8x80xf32> -> vector<8x80xf32>
    %7 = vector.broadcast %0 : vector<1x80xf32> to vector<8x80xf32>
    %8 = arith.addf %6, %7 : vector<8x80xf32>
    %cst_11 = arith.constant 0.000000e+00 : f32
    %9 = vector.broadcast %cst_11 : f32 to vector<8x80xf32>
    %10 = arith.maximumf %8, %9 : vector<8x80xf32>
    %11 = arith.truncf %10 : vector<8x80xf32> to vector<8x80xbf16>
    %c0_12 = arith.constant 0 : index
    %c0_13 = arith.constant 0 : index
    %12 = vector.load %arg4[%c0_12, %c0_13] : memref<80x40xbf16, #tpu.memory_space<vmem>>, vector<80x40xbf16>
    %cst_14 = arith.constant dense<0.000000e+00> : vector<8x40xf32>
    %13 = tpu.matmul %11, %12, %cst_14 {dimension_numbers = #tpu.dot_dimension_numbers<[1], [0], [0], [1], [0, 0, 1, 1], [], []>} : vector<8x80xbf16>, vector<80x40xbf16>, vector<8x40xf32> -> vector<8x40xf32>
    %14 = vector.broadcast %1 : vector<1x40xf32> to vector<8x40xf32>
    %15 = arith.addf %13, %14 : vector<8x40xf32>
    %cst_15 = arith.constant 0.000000e+00 : f32
    %16 = vector.broadcast %cst_15 : f32 to vector<8x40xf32>
    %17 = arith.maximumf %15, %16 : vector<8x40xf32>
    %18 = arith.truncf %17 : vector<8x40xf32> to vector<8x40xbf16>
    %c0_16 = arith.constant 0 : index
    %c0_17 = arith.constant 0 : index
    %19 = vector.load %arg6[%c0_16, %c0_17] : memref<40x15xbf16, #tpu.memory_space<vmem>>, vector<40x15xbf16>
    %cst_18 = arith.constant dense<0.000000e+00> : vector<8x15xf32>
    %20 = tpu.matmul %18, %19, %cst_18 {dimension_numbers = #tpu.dot_dimension_numbers<[1], [0], [0], [1], [0, 0, 1, 1], [], []>} : vector<8x40xbf16>, vector<40x15xbf16>, vector<8x15xf32> -> vector<8x15xf32>
    %21 = vector.broadcast %2 : vector<1x15xf32> to vector<8x15xf32>
    %22 = arith.addf %20, %21 : vector<8x15xf32>
    %cst_19 = arith.constant 0.000000e+00 : f32
    %23 = vector.broadcast %cst_19 : f32 to vector<8x15xf32>
    %24 = arith.maximumf %22, %23 : vector<8x15xf32>
    %25 = arith.truncf %24 : vector<8x15xf32> to vector<8x15xbf16>
    %c0_20 = arith.constant 0 : index
    %c0_21 = arith.constant 0 : index
    %26 = vector.load %arg8[%c0_20, %c0_21] : memref<15x2xbf16, #tpu.memory_space<vmem>>, vector<15x2xbf16>
    %cst_22 = arith.constant dense<0.000000e+00> : vector<8x2xf32>
    %27 = tpu.matmul %25, %26, %cst_22 {dimension_numbers = #tpu.dot_dimension_numbers<[1], [0], [0], [1], [0, 0, 1, 1], [], []>} : vector<8x15xbf16>, vector<15x2xbf16>, vector<8x2xf32> -> vector<8x2xf32>
    %28 = vector.broadcast %3 : vector<1x2xf32> to vector<8x2xf32>
    %29 = arith.addf %27, %28 : vector<8x2xf32>
    %c0_23 = arith.constant 0 : index
    %c0_24 = arith.constant 0 : index
    %30 = vector.load %arg10[%c0_23, %c0_24] : memref<8x2xf32, #tpu.memory_space<vmem>>, vector<8x2xf32>
    tpu.vector_store %arg10[%c0_23, %c0_24], %29 {strides = array<i32>} : memref<8x2xf32, #tpu.memory_space<vmem>>, vector<8x2xf32>,
    return
  }
  func.func @transform_0(%arg0: i32) -> (i32, i32) {
    %c0_i32 = arith.constant 0 : i32
    %c0_i32_0 = arith.constant 0 : i32
    return %arg0, %c0_i32 : i32, i32
  }
  func.func @transform_1(%arg0: i32) -> (i32, i32) {
    %c0_i32 = arith.constant 0 : i32
    %c0_i32_0 = arith.constant 0 : i32
    %c0_i32_1 = arith.constant 0 : i32
    return %c0_i32, %c0_i32_0 : i32, i32
  }
  func.func @transform_2(%arg0: i32) -> (i32, i32) {
    %c0_i32 = arith.constant 0 : i32
    %c0_i32_0 = arith.constant 0 : i32
    %c0_i32_1 = arith.constant 0 : i32
    return %c0_i32, %c0_i32_0 : i32, i32
  }
  func.func @transform_3(%arg0: i32) -> (i32, i32) {
    %c0_i32 = arith.constant 0 : i32
    %c0_i32_0 = arith.constant 0 : i32
    %c0_i32_1 = arith.constant 0 : i32
    return %c0_i32, %c0_i32_0 : i32, i32
  }
  func.func @transform_4(%arg0: i32) -> (i32, i32) {
    %c0_i32 = arith.constant 0 : i32
    %c0_i32_0 = arith.constant 0 : i32
    %c0_i32_1 = arith.constant 0 : i32
    return %c0_i32, %c0_i32_0 : i32, i32
  }
  func.func @transform_5(%arg0: i32) -> (i32, i32) {
    %c0_i32 = arith.constant 0 : i32
    %c0_i32_0 = arith.constant 0 : i32
    %c0_i32_1 = arith.constant 0 : i32
    return %c0_i32, %c0_i32_0 : i32, i32
  }
  func.func @transform_6(%arg0: i32) -> (i32, i32) {
    %c0_i32 = arith.constant 0 : i32
    %c0_i32_0 = arith.constant 0 : i32
    %c0_i32_1 = arith.constant 0 : i32
    return %c0_i32, %c0_i32_0 : i32, i32
  }
  func.func @transform_7(%arg0: i32) -> (i32, i32) {
    %c0_i32 = arith.constant 0 : i32
    %c0_i32_0 = arith.constant 0 : i32
    %c0_i32_1 = arith.constant 0 : i32
    return %c0_i32, %c0_i32_0 : i32, i32
  }
  func.func @transform_8(%arg0: i32) -> (i32, i32) {
    %c0_i32 = arith.constant 0 : i32
    %c0_i32_0 = arith.constant 0 : i32
    %c0_i32_1 = arith.constant 0 : i32
    return %c0_i32, %c0_i32_0 : i32, i32
  }
  func.func @transform_9(%arg0: i32) -> (i32, i32) {
    %c0_i32 = arith.constant 0 : i32
    %c0_i32_0 = arith.constant 0 : i32
    return %arg0, %c0_i32 : i32, i32
  }
}

</mosaic_0001>

<llo_original>
// kernel: tpu_custom_call.1
$region0: #{tpu_custom_call.1}
  #allocation0 [shape = 'u32[]', space=smem, size = 0x4, offset = 0x4, fixed_abs, tag = 'smem constant byte address 0x4 - core index']
  #allocation1 [shape = 'u32[144,128]{1,0:T(1,128)}', space=vmem, size = 0x12000, scoped, tag = 'internal scratch']
  %s0 = inlined_call_operand.vmem [shape: bf16[16,72], index: 0, kind: input, shape index: {}]
  %s1 = inlined_call_operand.vmem [shape: bf16[72,80], index: 1, kind: input, shape index: {}]
  %s2 = inlined_call_operand.vmem [shape: f32[1,80], index: 2, kind: input, shape index: {}]
  %s3 = inlined_call_operand.vmem [shape: bf16[80,40], index: 3, kind: input, shape index: {}]
  %s4 = inlined_call_operand.vmem [shape: f32[1,40], index: 4, kind: input, shape index: {}]
  %s5 = inlined_call_operand.vmem [shape: bf16[40,15], index: 5, kind: input, shape index: {}]
  %s6 = inlined_call_operand.vmem [shape: f32[1,15], index: 6, kind: input, shape index: {}]
  %s7 = inlined_call_operand.vmem [shape: bf16[15,2], index: 7, kind: input, shape index: {}]
  %s8 = inlined_call_operand.vmem [shape: f32[1,2], index: 8, kind: input, shape index: {}]
  %s9 = inlined_call_operand.vmem [shape: f32[16,2], index: 9, kind: output, shape index: {}]
  %s10 = sld [smem:[#allocation0]]
  $region69: #{tpu_custom_call.1} parent=0
    _
  %s12 = ssub.s32 1, %s10
  %s13 = scalar_select 0, %s12, %s10
  loop: start=0, step=1, limit=4
  $region2: #{tpu_custom_call.1} parent=0 // loop_pre_header
    _
  $region3: #{tpu_custom_call.1} parent=0 // loop_header
    %s15 = sphi 0, %s19
    %p16 = scmp.ge.s32.totalorder %s15, 4
    %s25 = sphi 0, %s27
    %s28 = sphi 0, %s25
    %s29 = sphi 0, %s28
    %s45 = sphi 0, %s29
    %s49 = sphi 0, %s49
    %s51 = sphi 0, %s49
    %s52 = sphi 0, %s51
    %s66 = sphi 0, %s52
    %s70 = sphi 0, %s70
    %s72 = sphi 0, %s70
    %s73 = sphi 0, %s72
    %s87 = sphi 0, %s73
    %s91 = sphi 0, %s91
    %s93 = sphi 0, %s91
    %s94 = sphi 0, %s93
    %s108 = sphi 0, %s94
    %s112 = sphi 0, %s112
    %s114 = sphi 0, %s112
    %s115 = sphi 0, %s114
    %s129 = sphi 0, %s115
    %s133 = sphi 0, %s133
    %s135 = sphi 0, %s133
    %s136 = sphi 0, %s135
    %s150 = sphi 0, %s136
    %s154 = sphi 0, %s154
    %s156 = sphi 0, %s154
    %s157 = sphi 0, %s156
    %s171 = sphi 0, %s157
    %s175 = sphi 0, %s175
    %s177 = sphi 0, %s175
    %s178 = sphi 0, %s177
    %s192 = sphi 0, %s178
    %s196 = sphi 0, %s196
    %s198 = sphi 0, %s196
    %s199 = sphi 0, %s198
    %s213 = sphi 0, %s199
    %s219 = sphi 0, %s221
    %s222 = sphi 0, %s219
    %s223 = sphi 0, %s222
    %s239 = sphi 0, %s223
  $region4: #{tpu_custom_call.1} parent=0 // loop_header_branch
    %18 = sbr.rel (%p16) target = $region8
  $region5: #{tpu_custom_call.1} parent=0 // loop_body
    %s20 = ssub.s32 %s15, 1
    %s21 = ssub.s32 %s15, 2
    %s22 = sadd.s32 %s15, 1
    %s23 = ssub.s32 %s15, %s22
    %p24 = scmp.eq.s32.totalorder %s23, 0
    %s26 = sadd.s32 %s25, 1
    %s27 = scalar_select %p24, %s25, %s26
    %p30 = pneg %p24
    %p31 = scmp.eq.s32.totalorder %s15, 1
    %p32 = por %p30, %p31
    %p33 = scmp.ne.s32.totalorder %s25, %s28
    %p34 = scmp.eq.s32.totalorder %s15, 0
    %p35 = por %p33, %p34
    %p36 = scmp.ne.s32.totalorder %s25, %s28
    %p37 = scmp.eq.s32.totalorder %s20, 1
    %p38 = por %p36, %p37
    %p39 = scmp.ne.s32.totalorder %s28, %s29
    %p40 = scmp.eq.s32.totalorder %s20, 0
    %p41 = por %p39, %p40
    %p42 = scmp.ne.s32.totalorder %s28, %s29
    %p43 = scmp.eq.s32.totalorder %s21, 1
    %p44 = por %p42, %p43
    %p46 = scmp.ne.s32.totalorder %s29, %s45
    %p47 = scmp.eq.s32.totalorder %s21, 0
    %p48 = por %p46, %p47
    %s50 = sadd.s32 %s49, 1
    %p53 = scmp.eq.s32.totalorder %s15, 1
    %p54 = scmp.ne.s32.totalorder %s49, %s51
    %p55 = scmp.eq.s32.totalorder %s15, 0
    %p56 = por %p54, %p55
    %p57 = scmp.ne.s32.totalorder %s49, %s51
    %p58 = scmp.eq.s32.totalorder %s20, 1
    %p59 = por %p57, %p58
    %p60 = scmp.ne.s32.totalorder %s51, %s52
    %p61 = scmp.eq.s32.totalorder %s20, 0
    %p62 = por %p60, %p61
    %p63 = scmp.ne.s32.totalorder %s51, %s52
    %p64 = scmp.eq.s32.totalorder %s21, 1
    %p65 = por %p63, %p64
    %p67 = scmp.ne.s32.totalorder %s52, %s66
    %p68 = scmp.eq.s32.totalorder %s21, 0
    %p69 = por %p67, %p68
    %s71 = sadd.s32 %s70, 1
    %p74 = scmp.eq.s32.totalorder %s15, 1
    %p75 = scmp.ne.s32.totalorder %s70, %s72
    %p76 = scmp.eq.s32.totalorder %s15, 0
    %p77 = por %p75, %p76
    %p78 = scmp.ne.s32.totalorder %s70, %s72
    %p79 = scmp.eq.s32.totalorder %s20, 1
    %p80 = por %p78, %p79
    %p81 = scmp.ne.s32.totalorder %s72, %s73
    %p82 = scmp.eq.s32.totalorder %s20, 0
    %p83 = por %p81, %p82
    %p84 = scmp.ne.s32.totalorder %s72, %s73
    %p85 = scmp.eq.s32.totalorder %s21, 1
    %p86 = por %p84, %p85
    %p88 = scmp.ne.s32.totalorder %s73, %s87
    %p89 = scmp.eq.s32.totalorder %s21, 0
    %p90 = por %p88, %p89
    %s92 = sadd.s32 %s91, 1
    %p95 = scmp.eq.s32.totalorder %s15, 1
    %p96 = scmp.ne.s32.totalorder %s91, %s93
    %p97 = scmp.eq.s32.totalorder %s15, 0
    %p98 = por %p96, %p97
    %p99 = scmp.ne.s32.totalorder %s91, %s93
    %p100 = scmp.eq.s32.totalorder %s20, 1
    %p101 = por %p99, %p100
    %p102 = scmp.ne.s32.totalorder %s93, %s94
    %p103 = scmp.eq.s32.totalorder %s20, 0
    %p104 = por %p102, %p103
    %p105 = scmp.ne.s32.totalorder %s93, %s94
    %p106 = scmp.eq.s32.totalorder %s21, 1
    %p107 = por %p105, %p106
    %p109 = scmp.ne.s32.totalorder %s94, %s108
    %p110 = scmp.eq.s32.totalorder %s21, 0
    %p111 = por %p109, %p110
    %s113 = sadd.s32 %s112, 1
    %p116 = scmp.eq.s32.totalorder %s15, 1
    %p117 = scmp.ne.s32.totalorder %s112, %s114
    %p118 = scmp.eq.s32.totalorder %s15, 0
    %p119 = por %p117, %p118
    %p120 = scmp.ne.s32.totalorder %s112, %s114
    %p121 = scmp.eq.s32.totalorder %s20, 1
    %p122 = por %p120, %p121
    %p123 = scmp.ne.s32.totalorder %s114, %s115
    %p124 = scmp.eq.s32.totalorder %s20, 0
    %p125 = por %p123, %p124
    %p126 = scmp.ne.s32.totalorder %s114, %s115
    %p127 = scmp.eq.s32.totalorder %s21, 1
    %p128 = por %p126, %p127
    %p130 = scmp.ne.s32.totalorder %s115, %s129
    %p131 = scmp.eq.s32.totalorder %s21, 0
    %p132 = por %p130, %p131
    %s134 = sadd.s32 %s133, 1
    %p137 = scmp.eq.s32.totalorder %s15, 1
    %p138 = scmp.ne.s32.totalorder %s133, %s135
    %p139 = scmp.eq.s32.totalorder %s15, 0
    %p140 = por %p138, %p139
    %p141 = scmp.ne.s32.totalorder %s133, %s135
    %p142 = scmp.eq.s32.totalorder %s20, 1
    %p143 = por %p141, %p142
    %p144 = scmp.ne.s32.totalorder %s135, %s136
    %p145 = scmp.eq.s32.totalorder %s20, 0
    %p146 = por %p144, %p145
    %p147 = scmp.ne.s32.totalorder %s135, %s136
    %p148 = scmp.eq.s32.totalorder %s21, 1
    %p149 = por %p147, %p148
    %p151 = scmp.ne.s32.totalorder %s136, %s150
    %p152 = scmp.eq.s32.totalorder %s21, 0
    %p153 = por %p151, %p152
    %s155 = sadd.s32 %s154, 1
    %p158 = scmp.eq.s32.totalorder %s15, 1
    %p159 = scmp.ne.s32.totalorder %s154, %s156
    %p160 = scmp.eq.s32.totalorder %s15, 0
    %p161 = por %p159, %p160
    %p162 = scmp.ne.s32.totalorder %s154, %s156
    %p163 = scmp.eq.s32.totalorder %s20, 1
    %p164 = por %p162, %p163
    %p165 = scmp.ne.s32.totalorder %s156, %s157
    %p166 = scmp.eq.s32.totalorder %s20, 0
    %p167 = por %p165, %p166
    %p168 = scmp.ne.s32.totalorder %s156, %s157
    %p169 = scmp.eq.s32.totalorder %s21, 1
    %p170 = por %p168, %p169
    %p172 = scmp.ne.s32.totalorder %s157, %s171
    %p173 = scmp.eq.s32.totalorder %s21, 0
    %p174 = por %p172, %p173
    %s176 = sadd.s32 %s175, 1
    %p179 = scmp.eq.s32.totalorder %s15, 1
    %p180 = scmp.ne.s32.totalorder %s175, %s177
    %p181 = scmp.eq.s32.totalorder %s15, 0
    %p182 = por %p180, %p181
    %p183 = scmp.ne.s32.totalorder %s175, %s177
    %p184 = scmp.eq.s32.totalorder %s20, 1
    %p185 = por %p183, %p184
    %p186 = scmp.ne.s32.totalorder %s177, %s178
    %p187 = scmp.eq.s32.totalorder %s20, 0
    %p188 = por %p186, %p187
    %p189 = scmp.ne.s32.totalorder %s177, %s178
    %p190 = scmp.eq.s32.totalorder %s21, 1
    %p191 = por %p189, %p190
    %p193 = scmp.ne.s32.totalorder %s178, %s192
    %p194 = scmp.eq.s32.totalorder %s21, 0
    %p195 = por %p193, %p194
    %s197 = sadd.s32 %s196, 1
    %p200 = scmp.eq.s32.totalorder %s15, 1
    %p201 = scmp.ne.s32.totalorder %s196, %s198
    %p202 = scmp.eq.s32.totalorder %s15, 0
    %p203 = por %p201, %p202
    %p204 = scmp.ne.s32.totalorder %s196, %s198
    %p205 = scmp.eq.s32.totalorder %s20, 1
    %p206 = por %p204, %p205
    %p207 = scmp.ne.s32.totalorder %s198, %s199
    %p208 = scmp.eq.s32.totalorder %s20, 0
    %p209 = por %p207, %p208
    %p210 = scmp.ne.s32.totalorder %s198, %s199
    %p211 = scmp.eq.s32.totalorder %s21, 1
    %p212 = por %p210, %p211
    %p214 = scmp.ne.s32.totalorder %s199, %s213
    %p215 = scmp.eq.s32.totalorder %s21, 0
    %p216 = por %p214, %p215
    %s217 = ssub.s32 %s15, %s22
    %p218 = scmp.eq.s32.totalorder %s217, 0
    %s220 = sadd.s32 %s219, 1
    %s221 = scalar_select %p218, %s219, %s220
    %p224 = pneg %p218
    %p225 = scmp.eq.s32.totalorder %s15, 1
    %p226 = por %p224, %p225
    %p227 = scmp.ne.s32.totalorder %s219, %s222
    %p228 = scmp.eq.s32.totalorder %s15, 0
    %p229 = por %p227, %p228
    %p230 = scmp.ne.s32.totalorder %s219, %s222
    %p231 = scmp.eq.s32.totalorder %s20, 1
    %p232 = por %p230, %p231
    %p233 = scmp.ne.s32.totalorder %s222, %s223
    %p234 = scmp.eq.s32.totalorder %s20, 0
    %p235 = por %p233, %p234
    %p236 = scmp.ne.s32.totalorder %s222, %s223
    %p237 = scmp.eq.s32.totalorder %s21, 1
    %p238 = por %p236, %p237
    %p240 = scmp.ne.s32.totalorder %s223, %s239
    %p241 = scmp.eq.s32.totalorder %s21, 0
    %p242 = por %p240, %p241
    %p243 = scmp.le.s32.totalorder 1, %s15
    %p244 = scmp.lt.s32.totalorder %s15, 3
    %p245 = pnand %p243, %p244
    %p246 = pneg %p245
    // Predicated region
    $region9: #{tpu_custom_call.1} parent=5 // pred_check
      _
    $region10: #{tpu_custom_call.1} parent=5 // pred_check_branch
      %248 = sbr.rel (%p245) target = $region12
    $region11: #{tpu_custom_call.1} parent=5 // pred_region
      %s249 = ssub.s32 %s15, 1
      // Predicated region
      $region13: #{tpu_custom_call.1} parent=11 // pred_check
        %p250 = pneg %p62
      $region14: #{tpu_custom_call.1} parent=11 // pred_check_branch
        %252 = sbr.rel (%p250) target = $region16
      $region15: #{tpu_custom_call.1} parent=11 // pred_region
        _
      $region16: #{tpu_custom_call.1} parent=11 // pred_fallthru
        _
      // Predicated region
      $region17: #{tpu_custom_call.1} parent=11 // pred_check
        %p253 = pneg %p83
      $region18: #{tpu_custom_call.1} parent=11 // pred_check_branch
        %255 = sbr.rel (%p253) target = $region20
      $region19: #{tpu_custom_call.1} parent=11 // pred_region
        _
      $region20: #{tpu_custom_call.1} parent=11 // pred_fallthru
        _
      // Predicated region
      $region21: #{tpu_custom_call.1} parent=11 // pred_check
        %p256 = pneg %p104
      $region22: #{tpu_custom_call.1} parent=11 // pred_check_branch
        %258 = sbr.rel (%p256) target = $region24
      $region23: #{tpu_custom_call.1} parent=11 // pred_region
        _
      $region24: #{tpu_custom_call.1} parent=11 // pred_fallthru
        _
      // Predicated region
      $region25: #{tpu_custom_call.1} parent=11 // pred_check
        %p259 = pneg %p125
      $region26: #{tpu_custom_call.1} parent=11 // pred_check_branch
        %261 = sbr.rel (%p259) target = $region28
      $region27: #{tpu_custom_call.1} parent=11 // pred_region
        _
      $region28: #{tpu_custom_call.1} parent=11 // pred_fallthru
        _
      // Predicated region
      $region29: #{tpu_custom_call.1} parent=11 // pred_check
        %p262 = pneg %p146
      $region30: #{tpu_custom_call.1} parent=11 // pred_check_branch
        %264 = sbr.rel (%p262) target = $region32
      $region31: #{tpu_custom_call.1} parent=11 // pred_region
        _
      $region32: #{tpu_custom_call.1} parent=11 // pred_fallthru
        _
      // Predicated region
      $region33: #{tpu_custom_call.1} parent=11 // pred_check
        %p265 = pneg %p167
      $region34: #{tpu_custom_call.1} parent=11 // pred_check_branch
        %267 = sbr.rel (%p265) target = $region36
      $region35: #{tpu_custom_call.1} parent=11 // pred_region
        _
      $region36: #{tpu_custom_call.1} parent=11 // pred_fallthru
        _
      // Predicated region
      $region37: #{tpu_custom_call.1} parent=11 // pred_check
        %p268 = pneg %p188
      $region38: #{tpu_custom_call.1} parent=11 // pred_check_branch
        %270 = sbr.rel (%p268) target = $region40
      $region39: #{tpu_custom_call.1} parent=11 // pred_region
        _
      $region40: #{tpu_custom_call.1} parent=11 // pred_fallthru
        _
      // Predicated region
      $region41: #{tpu_custom_call.1} parent=11 // pred_check
        %p271 = pneg %p209
      $region42: #{tpu_custom_call.1} parent=11 // pred_check_branch
        %273 = sbr.rel (%p271) target = $region44
      $region43: #{tpu_custom_call.1} parent=11 // pred_region
        _
      $region44: #{tpu_custom_call.1} parent=11 // pred_fallthru
        _
    $region12: #{tpu_custom_call.1} parent=5 // pred_fallthru
      _
    %p274 = scmp.lt.s32.totalorder %s15, 2
    // Predicated region
    $region45: #{tpu_custom_call.1} parent=5 // pred_check
      %p275 = pneg %p274
    $region46: #{tpu_custom_call.1} parent=5 // pred_check_branch
      %277 = sbr.rel (%p275) target = $region48
    $region47: #{tpu_custom_call.1} parent=5 // pred_region
      // Predicated region
      $region49: #{tpu_custom_call.1} parent=47 // pred_check
        %p278 = pneg %p35
      $region50: #{tpu_custom_call.1} parent=47 // pred_check_branch
        %280 = sbr.rel (%p278) target = $region52
      $region51: #{tpu_custom_call.1} parent=47 // pred_region
        %p281 = scmp.lt.s32.totalorder %s15, 1
        %s282 = scalar_select %p281, %s15, 1
        %s283 = smul.addr %s282, 4
        %s284 = scalar_lea.vmem %s0, %s283
      $region52: #{tpu_custom_call.1} parent=47 // pred_fallthru
        _
    $region48: #{tpu_custom_call.1} parent=5 // pred_fallthru
      _
    %p285 = scmp.le.s32.totalorder 1, %s15
    %p286 = scmp.lt.s32.totalorder %s15, 3
    %p287 = pnand %p285, %p286
    %p288 = pneg %p287
    // Predicated region
    $region53: #{tpu_custom_call.1} parent=5 // pred_check
      _
    $region54: #{tpu_custom_call.1} parent=5 // pred_check_branch
      %290 = sbr.rel (%p287) target = $region56
    $region55: #{tpu_custom_call.1} parent=5 // pred_region
      %s291 = ssub.s32 %s15, 1
      %p292 = scmp.lt.s32.totalorder %s20, 1
      %s293 = scalar_select %p292, %s20, 1
      %s294 = smul.addr %s293, 4
      %s295 = scalar_lea.vmem %s0, %s294
      %p296 = pneg %p41
      %p297 = pneg %p38
      %p298 = pneg %p62
      %p299 = pneg %p59
      %p300 = pneg %p83
      %p301 = pneg %p80
      %p302 = pneg %p104
      %p303 = pneg %p101
      %p304 = pneg %p125
      %p305 = pneg %p122
      %p306 = pneg %p146
      %p307 = pneg %p143
      %p308 = pneg %p167
      %p309 = pneg %p164
      %p310 = pneg %p188
      %p311 = pneg %p185
      %p312 = pneg %p209
      %p313 = pneg %p206
      %p314 = pneg %p235
      %p315 = pneg %p232
      %p316 = scmp.lt.s32.totalorder %s20, 1
      %s317 = scalar_select %p316, %s20, 1
      %s318 = smul.addr %s317, 8
      %s319 = scalar_lea.vmem %s9, %s318
      %p320 = scmp.lt.s32.totalorder %s20, 1
      %s321 = scalar_select %p320, %s20, 1
      %s322 = smul.addr %s321, 4
      %s323 = scalar_lea.vmem %s0, %s322
      %p324 = scmp.lt.s32.totalorder %s20, 1
      %s325 = scalar_select %p324, %s20, 1
      %s326 = smul.addr %s325, 8
      %s327 = scalar_lea.vmem %s9, %s326
      %v329 = vld [vmem:[%s2] sm:$0x1]
      %v330 = vld [vmem:[%s4] sm:$0x1]
      %v331 = vld [vmem:[%s6] sm:$0x1]
      %v332 = vld [vmem:[%s8] sm:$0x1]
      %v333 = vld [vmem:[%s323] sm:$0xf]
      %v334 = vld [vmem:[%s1] sm:$0xf]
      %v335 = vld [vmem:[%s1 + $0x4] sm:$0xf]
      %v336 = vld [vmem:[%s1 + $0x8] sm:$0xf]
      %v337 = vld [vmem:[%s1 + $0xc] sm:$0xf]
      %v338 = vld [vmem:[%s1 + $0x10] sm:$0xf]
      %v339 = vld [vmem:[%s1 + $0x14] sm:$0xf]
      %v340 = vld [vmem:[%s1 + $0x18] sm:$0xf]
      %v341 = vld [vmem:[%s1 + $0x1c] sm:$0xf]
      %v342 = vld [vmem:[%s1 + $0x20] sm:$0xf]
      %v344 = vlaneseq
      %v345 = vshrl.u32 %v344, 7
      %v346 = vsub.s32 0, %v345
      %v347 = vrot.slane %v329, %v346
      %v358 = vunpack.c.l.b16 %v334
      %v359 = vunpack.c.l.b16 %v335
      %v360 = vunpack.c.l.b16 %v336
      %v361 = vunpack.c.l.b16 %v337
      %v362 = vunpack.c.l.b16 %v338
      %v363 = vunpack.c.l.b16 %v339
      %v364 = vunpack.c.l.b16 %v340
      %v365 = vunpack.c.l.b16 %v341
      %v366 = vunpack.c.l.b16 %v342
      %v367 = vpack.c.b16 %v359, %v358
      %v368 = vpack.c.b16 %v361, %v360
      %v369 = vpack.c.b16 %v363, %v362
      %v370 = vpack.c.b16 %v365, %v364
      %v371 = vpack.c.b16 %v366, %v366
      %vm376 = vcmask 588800
      %v378 = vsel %vm376, %v333, 0
      %vm380 = vcmask 1043456
      %v382 = vsel %vm380, %v371, 0
      %384 = vmatprep.subr.bf16.mxu0 0
      %385 = vmatpush1.bf16.msra.mxu0 %v367
      %386 = vmatprep.subr.bf16.mxu0 0
      %387 = vmatpush1.bf16.msra.mxu0 %v368
      %388 = vmatprep.subr.bf16.mxu0 0
      %389 = vmatpush1.bf16.msra.mxu0 %v369
      %390 = vmatprep.subr.bf16.mxu0 0
      %391 = vmatpush1.bf16.msra.mxu0 %v370
      %392 = vmatprep.subr.bf16.mxu0 0
      %393 = vmatpush1.bf16.msra.mxu0 %v382
      %394 = vmatprep.subr.bf16.mxu0 0
      %395 = vmatpush1.bf16.msra.mxu0 0
      %396 = vmatprep.subr.bf16.mxu0 0
      %397 = vmatpush1.bf16.msra.mxu0 0
      %398 = vmatprep.subr.bf16.mxu0 0
      %399 = vmatpush1.bf16.msra.mxu0 0
      %400 = vmatprep.subr.bf16.mxu0 0
      %401 = vmatpush1.bf16.msra.mxu0 0
      %402 = vmatprep.subr.bf16.mxu0 0
      %403 = vmatpush1.bf16.msra.mxu0 0
      %404 = vmatprep.subr.bf16.mxu0 0
      %405 = vmatpush1.bf16.msra.mxu0 0
      %406 = vmatprep.subr.bf16.mxu0 0
      %407 = vmatpush1.bf16.msra.mxu0 0
      %408 = vmatprep.subr.bf16.mxu0 0
      %409 = vmatpush1.bf16.msra.mxu0 0
      %410 = vmatprep.subr.bf16.mxu0 0
      %411 = vmatpush1.bf16.msra.mxu0 0
      %412 = vmatprep.subr.bf16.mxu0 0
      %413 = vmatpush1.bf16.msra.mxu0 0
      %414 = vmatprep.subr.bf16.mxu0 0
      %415 = vmatpush1.bf16.msra.mxu0 0
      %416 = vmatprep.mubr.bf16.mxu0 0
      %417 = vmatmul.mubr.bf16.gmra.mrb[0].mxu0 %v378
      %v418 = vpop.f32.mrb[0].mxu0
      %v419 = vadd.f32 %v347, %v418
      %v420 = vpop.f32.mrb[0].mxu0
      %v421 = vpop.f32.mrb[0].mxu0
      %v422 = vpop.f32.mrb[0].mxu0
      %423 = vdwg.mxu0
      %v424 = vmax.f32 %v419, 0.0
      %v425 = vpack.c.bf16 %v424, %v424
      %v426 = vld [vmem:[%s3] sm:$0xf]
      %v427 = vld [vmem:[%s3 + $0x4] sm:$0xf]
      %v428 = vld [vmem:[%s3 + $0x8] sm:$0xf]
      %v429 = vld [vmem:[%s3 + $0xc] sm:$0xf]
      %v430 = vld [vmem:[%s3 + $0x10] sm:$0xf]
      %v431 = vld [vmem:[%s3 + $0x14] sm:$0xf]
      %v432 = vld [vmem:[%s3 + $0x18] sm:$0xf]
      %v433 = vld [vmem:[%s3 + $0x1c] sm:$0xf]
      %v434 = vld [vmem:[%s3 + $0x20] sm:$0xf]
      %v435 = vld [vmem:[%s3 + $0x24] sm:$0xf]
      %v437 = vlaneseq
      %v438 = vshrl.u32 %v437, 7
      %v439 = vsub.s32 0, %v438
      %v440 = vrot.slane %v330, %v439
      %v452 = vunpack.c.l.b16 %v426
      %v453 = vunpack.c.l.b16 %v427
      %v454 = vunpack.c.l.b16 %v428
      %v455 = vunpack.c.l.b16 %v429
      %v456 = vunpack.c.l.b16 %v430
      %v457 = vunpack.c.l.b16 %v431
      %v458 = vunpack.c.l.b16 %v432
      %v459 = vunpack.c.l.b16 %v433
      %v460 = vunpack.c.l.b16 %v434
      %v461 = vunpack.c.l.b16 %v435
      %v462 = vpack.c.b16 %v453, %v452
      %v463 = vpack.c.b16 %v455, %v454
      %v464 = vpack.c.b16 %v457, %v456
      %v465 = vpack.c.b16 %v459, %v458
      %v466 = vpack.c.b16 %v461, %v460
      %vm472 = vcmask 654336
      %v474 = vsel %vm472, %v425, 0
      %476 = vmatprep.subr.bf16.mxu0 0
      %477 = vmatpush1.bf16.msra.mxu0 %v462
      %478 = vmatprep.subr.bf16.mxu0 0
      %479 = vmatpush1.bf16.msra.mxu0 %v463
      %480 = vmatprep.subr.bf16.mxu0 0
      %481 = vmatpush1.bf16.msra.mxu0 %v464
      %482 = vmatprep.subr.bf16.mxu0 0
      %483 = vmatpush1.bf16.msra.mxu0 %v465
      %484 = vmatprep.subr.bf16.mxu0 0
      %485 = vmatpush1.bf16.msra.mxu0 %v466
      %486 = vmatprep.subr.bf16.mxu0 0
      %487 = vmatpush1.bf16.msra.mxu0 0
      %488 = vmatprep.subr.bf16.mxu0 0
      %489 = vmatpush1.bf16.msra.mxu0 0
      %490 = vmatprep.subr.bf16.mxu0 0
      %491 = vmatpush1.bf16.msra.mxu0 0
      %492 = vmatprep.subr.bf16.mxu0 0
      %493 = vmatpush1.bf16.msra.mxu0 0
      %494 = vmatprep.subr.bf16.mxu0 0
      %495 = vmatpush1.bf16.msra.mxu0 0
      %496 = vmatprep.subr.bf16.mxu0 0
      %497 = vmatpush1.bf16.msra.mxu0 0
      %498 = vmatprep.subr.bf16.mxu0 0
      %499 = vmatpush1.bf16.msra.mxu0 0
      %500 = vmatprep.subr.bf16.mxu0 0
      %501 = vmatpush1.bf16.msra.mxu0 0
      %502 = vmatprep.subr.bf16.mxu0 0
      %503 = vmatpush1.bf16.msra.mxu0 0
      %504 = vmatprep.subr.bf16.mxu0 0
      %505 = vmatpush1.bf16.msra.mxu0 0
      %506 = vmatprep.subr.bf16.mxu0 0
      %507 = vmatpush1.bf16.msra.mxu0 0
      %508 = vmatprep.mubr.bf16.mxu0 0
      %509 = vmatmul.mubr.bf16.gmra.mrb[0].mxu0 %v474
      %v510 = vpop.f32.mrb[0].mxu0
      %v511 = vadd.f32 %v440, %v510
      %v512 = vpop.f32.mrb[0].mxu0
      %v513 = vpop.f32.mrb[0].mxu0
      %v514 = vpop.f32.mrb[0].mxu0
      %515 = vdwg.mxu0
      %v516 = vmax.f32 %v511, 0.0
      %v517 = vpack.c.bf16 %v516, %v516
      %v518 = vld [vmem:[%s5] sm:$0xf]
      %v519 = vld [vmem:[%s5 + $0x4] sm:$0xf]
      %v520 = vld [vmem:[%s5 + $0x8] sm:$0xf]
      %v521 = vld [vmem:[%s5 + $0xc] sm:$0xf]
      %v522 = vld [vmem:[%s5 + $0x10] sm:$0xf]
      %v524 = vlaneseq
      %v525 = vshrl.u32 %v524, 7
      %v526 = vsub.s32 0, %v525
      %v527 = vrot.slane %v331, %v526
      %v534 = vunpack.c.l.b16 %v518
      %v535 = vunpack.c.l.b16 %v519
      %v536 = vunpack.c.l.b16 %v520
      %v537 = vunpack.c.l.b16 %v521
      %v538 = vunpack.c.l.b16 %v522
      %v539 = vpack.c.b16 %v535, %v534
      %v540 = vpack.c.b16 %v537, %v536
      %v541 = vpack.c.b16 %v538, %v538
      %vm544 = vcmask 326656
      %v546 = vsel %vm544, %v517, 0
      %v549 = vsel %vm380, %v541, 0
      %551 = vmatprep.subr.bf16.mxu0 0
      %552 = vmatpush1.bf16.msra.mxu0 %v539
      %553 = vmatprep.subr.bf16.mxu0 0
      %554 = vmatpush1.bf16.msra.mxu0 %v540
      %555 = vmatprep.subr.bf16.mxu0 0
      %556 = vmatpush1.bf16.msra.mxu0 %v549
      %557 = vmatprep.subr.bf16.mxu0 0
      %558 = vmatpush1.bf16.msra.mxu0 0
      %559 = vmatprep.subr.bf16.mxu0 0
      %560 = vmatpush1.bf16.msra.mxu0 0
      %561 = vmatprep.subr.bf16.mxu0 0
      %562 = vmatpush1.bf16.msra.mxu0 0
      %563 = vmatprep.subr.bf16.mxu0 0
      %564 = vmatpush1.bf16.msra.mxu0 0
      %565 = vmatprep.subr.bf16.mxu0 0
      %566 = vmatpush1.bf16.msra.mxu0 0
      %567 = vmatprep.subr.bf16.mxu0 0
      %568 = vmatpush1.bf16.msra.mxu0 0
      %569 = vmatprep.subr.bf16.mxu0 0
      %570 = vmatpush1.bf16.msra.mxu0 0
      %571 = vmatprep.subr.bf16.mxu0 0
      %572 = vmatpush1.bf16.msra.mxu0 0
      %573 = vmatprep.subr.bf16.mxu0 0
      %574 = vmatpush1.bf16.msra.mxu0 0
      %575 = vmatprep.subr.bf16.mxu0 0
      %576 = vmatpush1.bf16.msra.mxu0 0
      %577 = vmatprep.subr.bf16.mxu0 0
      %578 = vmatpush1.bf16.msra.mxu0 0
      %579 = vmatprep.subr.bf16.mxu0 0
      %580 = vmatpush1.bf16.msra.mxu0 0
      %581 = vmatprep.subr.bf16.mxu0 0
      %582 = vmatpush1.bf16.msra.mxu0 0
      %583 = vmatprep.mubr.bf16.mxu0 0
      %584 = vmatmul.mubr.bf16.gmra.mrb[0].mxu0 %v546
      %v585 = vpop.f32.mrb[0].mxu0
      %v586 = vadd.f32 %v527, %v585
      %v587 = vpop.f32.mrb[0].mxu0
      %v588 = vpop.f32.mrb[0].mxu0
      %v589 = vpop.f32.mrb[0].mxu0
      %590 = vdwg.mxu0
      %v591 = vmax.f32 %v586, 0.0
      %v592 = vpack.c.bf16 %v591, %v591
      %v593 = vld [vmem:[%s7] sm:$0xf]
      %v594 = vld [vmem:[%s7 + $0x4] sm:$0xf]
      %v596 = vlaneseq
      %v597 = vshrl.u32 %v596, 7
      %v598 = vsub.s32 0, %v597
      %v599 = vrot.slane %v332, %v598
      %v603 = vunpack.c.l.b16 %v593
      %v604 = vunpack.c.l.b16 %v594
      %v605 = vpack.c.b16 %v604, %v603
      %vm606 = vcmask 121856
      %v608 = vsel %vm606, %v592, 0
      %vm610 = vcmask 1046528
      %vm611 = vcmask 1047552
      %v612 = vsel %vm610, 4294967295, 65535
      %v613 = vsel %vm611, %v612, 0
      %v615 = vand.u32 %v605, %v613
      %617 = vmatprep.subr.bf16.mxu0 0
      %618 = vmatpush1.bf16.msra.mxu0 %v615
      %619 = vmatprep.subr.bf16.mxu0 0
      %620 = vmatpush1.bf16.msra.mxu0 0
      %621 = vmatprep.subr.bf16.mxu0 0
      %622 = vmatpush1.bf16.msra.mxu0 0
      %623 = vmatprep.subr.bf16.mxu0 0
      %624 = vmatpush1.bf16.msra.mxu0 0
      %625 = vmatprep.subr.bf16.mxu0 0
      %626 = vmatpush1.bf16.msra.mxu0 0
      %627 = vmatprep.subr.bf16.mxu0 0
      %628 = vmatpush1.bf16.msra.mxu0 0
      %629 = vmatprep.subr.bf16.mxu0 0
      %630 = vmatpush1.bf16.msra.mxu0 0
      %631 = vmatprep.subr.bf16.mxu0 0
      %632 = vmatpush1.bf16.msra.mxu0 0
      %633 = vmatprep.subr.bf16.mxu0 0
      %634 = vmatpush1.bf16.msra.mxu0 0
      %635 = vmatprep.subr.bf16.mxu0 0
      %636 = vmatpush1.bf16.msra.mxu0 0
      %637 = vmatprep.subr.bf16.mxu0 0
      %638 = vmatpush1.bf16.msra.mxu0 0
      %639 = vmatprep.subr.bf16.mxu0 0
      %640 = vmatpush1.bf16.msra.mxu0 0
      %641 = vmatprep.subr.bf16.mxu0 0
      %642 = vmatpush1.bf16.msra.mxu0 0
      %643 = vmatprep.subr.bf16.mxu0 0
      %644 = vmatpush1.bf16.msra.mxu0 0
      %645 = vmatprep.subr.bf16.mxu0 0
      %646 = vmatpush1.bf16.msra.mxu0 0
      %647 = vmatprep.subr.bf16.mxu0 0
      %648 = vmatpush1.bf16.msra.mxu0 0
      %649 = vmatprep.mubr.bf16.mxu0 0
      %650 = vmatmul.mubr.bf16.gmra.mrb[0].mxu0 %v608
      %v651 = vpop.f32.mrb[0].mxu0
      %v652 = vadd.f32 %v599, %v651
      %v653 = vpop.f32.mrb[0].mxu0
      %v654 = vpop.f32.mrb[0].mxu0
      %v655 = vpop.f32.mrb[0].mxu0
      %656 = vdwg.mxu0
      %vm657 = vcmask 15360
      %658 = vst.msk [vmem:[%s327] sm:$0xff] %vm657, %v652
      %p659 = scmp.lt.s32.totalorder %s20, 1
      %s660 = scalar_select %p659, %s20, 1
      %s661 = smul.addr %s660, 8
      %s662 = scalar_lea.vmem %s9, %s661
      // Predicated region
      $region57: #{tpu_custom_call.1} parent=55 // pred_check
        %p663 = pneg %p232
      $region58: #{tpu_custom_call.1} parent=55 // pred_check_branch
        %665 = sbr.rel (%p663) target = $region60
      $region59: #{tpu_custom_call.1} parent=55 // pred_region
        _
      $region60: #{tpu_custom_call.1} parent=55 // pred_fallthru
        _
    $region56: #{tpu_custom_call.1} parent=5 // pred_fallthru
      _
    %p666 = scmp.le.s32.totalorder 2, %s15
    // Predicated region
    $region61: #{tpu_custom_call.1} parent=5 // pred_check
      %p667 = pneg %p666
    $region62: #{tpu_custom_call.1} parent=5 // pred_check_branch
      %669 = sbr.rel (%p667) target = $region64
    $region63: #{tpu_custom_call.1} parent=5 // pred_region
      %s670 = ssub.s32 %s15, 2
      // Predicated region
      $region65: #{tpu_custom_call.1} parent=63 // pred_check
        %p671 = pneg %p238
      $region66: #{tpu_custom_call.1} parent=63 // pred_check_branch
        %673 = sbr.rel (%p671) target = $region68
      $region67: #{tpu_custom_call.1} parent=63 // pred_region
        %p674 = scmp.lt.s32.totalorder %s21, 1
        %s675 = scalar_select %p674, %s21, 1
        %s676 = smul.addr %s675, 8
        %s677 = scalar_lea.vmem %s9, %s676
      $region68: #{tpu_custom_call.1} parent=63 // pred_fallthru
        _
    $region64: #{tpu_custom_call.1} parent=5 // pred_fallthru
      _
  $region6: #{tpu_custom_call.1} parent=0 // loop_footer
    %s19 = sadd.s32 1, %s15
  $region7: #{tpu_custom_call.1} parent=0 // loop_footer_branch
    %14 = sbr.rel target = $region3
  $region8: #{tpu_custom_call.1} parent=0 // loop_exit
    _

</llo_original>
